<compile_context>
chip_gen: v5e
topology: v5e:2x2
jax: 0.10.0
libtpu: 0.0.40
codegen_flags: <defaults>
</compile_context>

<pallas_src>
import functools

import jax
import jax.numpy as jnp
from jax import lax
from jax.experimental import pallas as pl
from jax.experimental.pallas import tpu as pltpu


def _round_up(a, m):
    return ((a + m - 1) // m) * m


def _cnn_kernel(Tp, fs_max, CH, NCc,
                x_ref, wcol_ref, bp_ref, mask_ref, wfc_ref, bfc_ref,
                out_ref, pooled_ref):
    """One grid step = one batch tile of TB samples, processed in CH-sample chunks.

    x_ref     : [TB, T, E]          bf16  raw embedded tokens (no time padding).
    wcol_ref  : [fs_max*E, NCFp]    bf16  packed im2col conv weight (zero rows
                                          for k >= fs_i inside bank i's columns).
    bp_ref    : [1, NCFp]           f32   packed conv bias (0 in padded columns).
    mask_ref  : [Tp, NCFp]          f32   1.0 where position t is valid for the
                                          bank owning that column, else 0.0.
    wfc_ref   : [NCFp, OUTp]        bf16  final linear weight (zero padded).
    bfc_ref   : [1, OUTp]           f32   final linear bias (zero padded).
    out_ref   : [TB, OUTp]          f32   logits for this batch tile.
    pooled_ref: [TB, NCFp]          f32   VMEM scratch, pooled features.
    """
    _, T, E = x_ref.shape
    rows = CH * Tp
    ncfp = wcol_ref.shape[-1]

    def chunk(c, carry):
        s = pl.multiple_of(c * CH, 8)
        xc = x_ref[pl.ds(s, CH), :, :]                       # [CH, T, E] bf16
        if Tp > T:                                           # per-sample time pad
            xc = jnp.concatenate(
                [xc, jnp.zeros((CH, Tp - T, E), xc.dtype)], axis=1)
        xf = xc.reshape(rows, E)                             # [CH*Tp, E]
        if fs_max > 1:                                       # trailing rows so all
            xf = jnp.concatenate(                            # shifts share length
                [xf, jnp.zeros((fs_max - 1, E), xf.dtype)], axis=0)

        # im2col: one fused MXU matmul with K = fs_max*E covers every filter
        # size and every sample in the chunk (bf16 operands, f32 accumulate).
        xcol = jnp.concatenate([xf[k:k + rows, :] for k in range(fs_max)],
                               axis=-1)                      # [rows, fs_max*E]
        acc = jnp.dot(xcol, wcol_ref[...],
                      preferred_element_type=jnp.float32)    # [rows, NCFp] f32

        acc = jnp.maximum(acc + bp_ref[...], 0.0)            # bias + ReLU (VPU)
        # Zero invalid / cross-sample positions (ReLU output >= 0, so the masked
        # zeros never affect the max), then max-pool over time.
        acc = acc.reshape(CH, Tp, ncfp) * mask_ref[...]
        pooled_ref[pl.ds(s, CH), :] = jnp.max(acc, axis=1)   # [CH, NCFp]
        return carry

    lax.fori_loop(0, NCc, chunk, 0, unroll=(NCc <= 4))

    # Dropout is identity in eval / inference mode.
    # TODO(synk): training-mode dropout (PRNG mask via pltpu.prng_*) not implemented.
    logits = jnp.dot(pooled_ref[...].astype(wfc_ref.dtype), wfc_ref[...],
                     preferred_element_type=jnp.float32) + bfc_ref[...]
    out_ref[...] = logits.astype(out_ref.dtype)


def _vmem_bytes(TB, CH, T, Tp, E, fs_max, NCFp, OUTp):
    """Rough VMEM footprint: double-buffered blocks + resident consts + temps."""
    bf, f4 = 2, 4
    rows = CH * Tp
    x_blk = TB * T * E * bf * 2                      # bf16 input, double buffer
    out_blk = TB * OUTp * f4 * 2
    consts = 2 * (fs_max * E * NCFp * bf             # wcol
                  + 8 * NCFp * f4                    # bp (sublane padded)
                  + Tp * NCFp * f4                   # mask
                  + NCFp * OUTp * bf                 # wfc
                  + 8 * OUTp * f4)                   # bfc
    scratch = TB * NCFp * f4                         # pooled scratch
    temps = ((rows + fs_max) * E * bf                # padded flat chunk
             + rows * fs_max * E * bf                # im2col operand
             + 2 * rows * NCFp * f4                  # conv acc + masked copy
             + TB * OUTp * f4)                       # logits
    return x_blk + out_blk + consts + scratch + temps


def _pick_chunk(TB, Tp, rows_target=1024):
    """Samples per inner chunk: ~rows_target rows, multiple of 8, divides TB."""
    ch = (rows_target // max(Tp, 1)) // 8 * 8
    ch = max(8, min(ch, TB))
    while TB % ch:
        ch -= 8
    return ch


def cnn_forward(text, params, filter_sizes, *, batch_tile=128,
                vmem_budget_bytes=40 * 2**20):
    """text: [B, T] int32 token ids. Returns logits [B, output_dim] (f32)."""
    filter_sizes = tuple(filter_sizes)
    fs_max = max(filter_sizes)
    B, T = text.shape
    if T < fs_max:
        raise ValueError(
            f"sequence length {T} < largest filter size {fs_max} "
            "(PyTorch Conv2d would also fail here)")

    # bf16 activation stream (intentional inference precision choice).
    # TODO(synk): in production store the embedding table in bf16 to avoid this cast.
    emb_bf16 = params["embedding"].astype(jnp.bfloat16)      # [V, E]
    E = emb_bf16.shape[1]
    F = params["conv_w"][0].shape[-1]
    OUT = params["fc_b"].shape[-1]
    nc = len(filter_sizes)
    NCF = nc * F
    NCFp = _round_up(NCF, 128)                               # lane-dense columns
    OUTp = _round_up(OUT, 128)                               # lane-dense output
    Tp = _round_up(T, 8)                                     # per-sample rows

    # ---- batch-tile selection: megacore split + VMEM budget ----
    batch_tile = max(8, _round_up(batch_tile, 8))
    if B > batch_tile:
        TB = batch_tile
    else:
        # aim for >= 2 grid steps (v7x megacore) whenever B >= 16
        TB = min(_round_up(-(-B // 2), 8), _round_up(B, 8))
    CH = _pick_chunk(TB, Tp)
    while TB > 8 and _vmem_bytes(TB, CH, T, Tp, E, fs_max, NCFp, OUTp) > vmem_budget_bytes:
        TB -= 8
        CH = _pick_chunk(TB, Tp)
    NCc = TB // CH
    nb = pl.cdiv(B, TB)
    Bp = nb * TB

    # ---- activation: pad token ids (cheap) and gather straight to bf16 ----
    # No wrapper-side time-padding / reshape round trip over the activation.
    # TODO(synk): for large vocab/E, scalar-prefetch token ids and DMA-gather
    # embedding rows in-kernel to avoid the [B,T,E] HBM gather output entirely.
    text_p = jnp.pad(text, ((0, Bp - B), (0, 0))) if Bp > B else text
    x = emb_bf16[text_p]                                     # [Bp, T, E] bf16

    # ---- pack all conv banks into one im2col weight [fs_max*E, NCFp] ----
    wcol = jnp.zeros((fs_max, E, NCFp), jnp.float32)
    for i, fs in enumerate(filter_sizes):
        wcol = wcol.at[:fs, :, i * F:(i + 1) * F].set(params["conv_w"][i])
    wcol = wcol.reshape(fs_max * E, NCFp).astype(jnp.bfloat16)
    bp = jnp.zeros((1, NCFp), jnp.float32).at[0, :NCF].set(
        jnp.concatenate([params["conv_b"][i] for i in range(nc)]))

    # Validity mask: position t of bank i is valid iff t < T - fs_i + 1.
    t_idx = jnp.arange(Tp)[:, None]
    mask = jnp.zeros((Tp, NCFp), jnp.float32).at[:, :NCF].set(
        jnp.concatenate(
            [jnp.broadcast_to((t_idx < (T - fs + 1)).astype(jnp.float32), (Tp, F))
             for fs in filter_sizes], axis=1))

    w_fc = jnp.zeros((NCFp, OUTp), jnp.float32).at[:NCF, :OUT].set(
        params["fc_w"]).astype(jnp.bfloat16)
    b_fc = jnp.zeros((1, OUTp), jnp.float32).at[0, :OUT].set(params["fc_b"])

    vmem_limit = int(min(64 * 2**20, max(
        16 * 2**20,
        int(1.5 * _vmem_bytes(TB, CH, T, Tp, E, fs_max, NCFp, OUTp)))))

    kernel = functools.partial(_cnn_kernel, Tp, fs_max, CH, NCc)

    out = pl.pallas_call(
        kernel,
        out_shape=jax.ShapeDtypeStruct((Bp, OUTp), jnp.float32),
        grid_spec=pltpu.PrefetchScalarGridSpec(
            num_scalar_prefetch=0,
            grid=(nb,),
            in_specs=[
                pl.BlockSpec((TB, T, E), lambda i: (i, 0, 0)),
                # Constant-index_map operands stay resident across grid steps.
                # TODO(synk): pipeline_mode=pl.Buffered(1) to drop their second
                # buffer once verified on the target jax version.
                pl.BlockSpec((fs_max * E, NCFp), lambda i: (0, 0)),
                pl.BlockSpec((1, NCFp), lambda i: (0, 0)),
                pl.BlockSpec((Tp, NCFp), lambda i: (0, 0)),
                pl.BlockSpec((NCFp, OUTp), lambda i: (0, 0)),
                pl.BlockSpec((1, OUTp), lambda i: (0, 0)),
            ],
            out_specs=pl.BlockSpec((TB, OUTp), lambda i: (i, 0)),
            scratch_shapes=[pltpu.VMEM((TB, NCFp), jnp.float32)],
        ),
        compiler_params=pltpu.CompilerParams(
            dimension_semantics=("parallel",),
            vmem_limit_bytes=vmem_limit,
        ),
    )(x, wcol, bp, mask, w_fc, b_fc)
    return out[:B, :OUT]


def cnn_reference(text, params, filter_sizes):
    """Pure-JAX f32 reference matching the PyTorch forward (eval mode)."""
    emb = params["embedding"][text]                # [B, T, E]
    B, T, E = emb.shape
    pooled = []
    for i, fs in enumerate(filter_sizes):
        w = params["conv_w"][i]                    # [fs, E, F]
        b = params["conv_b"][i]
        L = T - fs + 1
        acc = jnp.zeros((B, L, w.shape[-1]), jnp.float32)
        for k in range(fs):
            acc = acc + jnp.einsum("ble,ef->blf", emb[:, k:k + L, :], w[k])
        acc = jnp.maximum(acc + b, 0.0)
        pooled.append(jnp.max(acc, axis=1))
    cat = jnp.concatenate(pooled, axis=-1)
    return cat @ params["fc_w"] + params["fc_b"]


def init_params(key, vocab_size, embedding_dim, n_filters, filter_sizes, output_dim):
    keys = jax.random.split(key, 3 + 2 * len(filter_sizes))
    params = {}
    params["embedding"] = (
        jax.random.normal(keys[0], (vocab_size, embedding_dim), jnp.float32) * 0.1
    )
    params["conv_w"] = []
    params["conv_b"] = []
    for i, fs in enumerate(filter_sizes):
        # torch Conv2d weight is [F, 1, fs, E]; stored here as [fs, E, F].
        params["conv_w"].append(
            jax.random.normal(keys[1 + 2 * i], (fs, embedding_dim, n_filters),
                              jnp.float32) * 0.05
        )
        params["conv_b"].append(
            jax.random.normal(keys[2 + 2 * i], (n_filters,), jnp.float32) * 0.01
        )
    in_features = len(filter_sizes) * n_filters
    # torch Linear weight is [OUT, in]; stored transposed as [in, OUT].
    params["fc_w"] = (
        jax.random.normal(keys[-2], (in_features, output_dim), jnp.float32) * 0.05
    )
    params["fc_b"] = jax.random.normal(keys[-1], (output_dim,), jnp.float32) * 0.01
    return params


if __name__ == "__main__":
    vocab_size = 50
    embedding_dim = 32
    n_filters = 8
    filter_sizes = (3, 4, 5)
    output_dim = 4
    batch = 2
    seq_len = 16

    key = jax.random.PRNGKey(0)
    pkey, tkey = jax.random.split(key)
    params = init_params(pkey, vocab_size, embedding_dim, n_filters,
                         filter_sizes, output_dim)
    text = jax.random.randint(tkey, (batch, seq_len), 0, vocab_size, dtype=jnp.int32)

    fwd = jax.jit(lambda t, p: cnn_forward(t, p, filter_sizes))
    logits = fwd(text, params)
    jax.block_until_ready(logits)

    assert logits.shape == (batch, output_dim)
    assert logits.dtype == jnp.float32

    ref = cnn_reference(text, params, filter_sizes)
    err = float(jnp.max(jnp.abs(logits - ref)))
    assert err < 2e-2, f"mismatch vs f32 reference: max abs err {err}"

    print("KERNEL_OK")
</pallas_src>

<mosaic_0001>
module attributes {stable_mosaic.version = 11 : i64} {
  func.func @_cnn_kernel(%arg0: i32, %arg1: memref<8x16x32xbf16, #tpu.memory_space<vmem>>, %arg2: memref<160x128xbf16, #tpu.memory_space<vmem>>, %arg3: memref<1x128xf32, #tpu.memory_space<vmem>>, %arg4: memref<16x128xf32, #tpu.memory_space<vmem>>, %arg5: memref<128x128xbf16, #tpu.memory_space<vmem>>, %arg6: memref<1x128xf32, #tpu.memory_space<vmem>>, %arg7: memref<8x128xf32, #tpu.memory_space<vmem>>, %arg8: memref<8x128xf32, #tpu.memory_space<vmem>>) attributes {dimension_semantics = [#tpu.dimension_semantics<parallel>], iteration_bounds = array<i64: 1>, scalar_prefetch = 0 : i64, scratch_operands = 1 : i64, tpu.core_type = #tpu.core_type<tc>, window_params = [{transform_indices = @transform_0, window_bounds = array<i64: 8, 16, 32>}, {pipeline_mode = #tpu.pipeline_mode<synchronous>, transform_indices = @transform_1, window_bounds = array<i64: 160, 128>}, {pipeline_mode = #tpu.pipeline_mode<synchronous>, transform_indices = @transform_2, window_bounds = array<i64: 1, 128>}, {pipeline_mode = #tpu.pipeline_mode<synchronous>, transform_indices = @transform_3, window_bounds = array<i64: 16, 128>}, {pipeline_mode = #tpu.pipeline_mode<synchronous>, transform_indices = @transform_4, window_bounds = array<i64: 128, 128>}, {pipeline_mode = #tpu.pipeline_mode<synchronous>, transform_indices = @transform_5, window_bounds = array<i64: 1, 128>}, {transform_indices = @transform_6, window_bounds = array<i64: 8, 128>}]} {
    %c0_i32 = arith.constant 0 : i32
    %c8_i32 = arith.constant 8 : i32
    %0 = arith.muli %c0_i32, %c8_i32 : i32
    %1 = tpu.assume_multiple %0, 8 : i32
    %2 = arith.index_cast %1 : i32 to index
    %c0 = arith.constant 0 : index
    %c0_0 = arith.constant 0 : index
    %3 = vector.load %arg1[%2, %c0, %c0_0] : memref<8x16x32xbf16, #tpu.memory_space<vmem>>, vector<8x16x32xbf16>
    %4 = vector.shape_cast %3 : vector<8x16x32xbf16> to vector<128x32xbf16>
    %cst = arith.constant 0.000000e+00 : bf16
    %5 = vector.broadcast %cst : bf16 to vector<4x32xbf16>
    %6 = tpu.concatenate %4, %5 in 0 : vector<128x32xbf16>, vector<4x32xbf16> -> vector<132x32xbf16>
    %7 = vector.extract_strided_slice %6 {offsets = [0, 0], sizes = [128, 32], strides = [1, 1]} : vector<132x32xbf16> to vector<128x32xbf16>
    %8 = vector.extract_strided_slice %6 {offsets = [1, 0], sizes = [128, 32], strides = [1, 1]} : vector<132x32xbf16> to vector<128x32xbf16>
    %9 = vector.extract_strided_slice %6 {offsets = [2, 0], sizes = [128, 32], strides = [1, 1]} : vector<132x32xbf16> to vector<128x32xbf16>
    %10 = vector.extract_strided_slice %6 {offsets = [3, 0], sizes = [128, 32], strides = [1, 1]} : vector<132x32xbf16> to vector<128x32xbf16>
    %11 = vector.extract_strided_slice %6 {offsets = [4, 0], sizes = [128, 32], strides = [1, 1]} : vector<132x32xbf16> to vector<128x32xbf16>
    %12 = tpu.concatenate %7, %8, %9, %10, %11 in 1 : vector<128x32xbf16>, vector<128x32xbf16>, vector<128x32xbf16>, vector<128x32xbf16>, vector<128x32xbf16> -> vector<128x160xbf16>
    %c0_1 = arith.constant 0 : index
    %c0_2 = arith.constant 0 : index
    %13 = vector.load %arg2[%c0_1, %c0_2] : memref<160x128xbf16, #tpu.memory_space<vmem>>, vector<160x128xbf16>
    %cst_3 = arith.constant dense<0.000000e+00> : vector<128x128xf32>
    %14 = tpu.matmul %12, %13, %cst_3 {dimension_numbers = #tpu.dot_dimension_numbers<[1], [0], [0], [1], [0, 0, 1, 1], [], []>} : vector<128x160xbf16>, vector<160x128xbf16>, vector<128x128xf32> -> vector<128x128xf32>
    %c0_4 = arith.constant 0 : index
    %c0_5 = arith.constant 0 : index
    %15 = vector.load %arg3[%c0_4, %c0_5] : memref<1x128xf32, #tpu.memory_space<vmem>>, vector<1x128xf32>
    %16 = vector.broadcast %15 : vector<1x128xf32> to vector<128x128xf32>
    %17 = arith.addf %14, %16 : vector<128x128xf32>
    %cst_6 = arith.constant 0.000000e+00 : f32
    %18 = vector.broadcast %cst_6 : f32 to vector<128x128xf32>
    %19 = arith.maximumf %17, %18 : vector<128x128xf32>
    %20 = vector.shape_cast %19 : vector<128x128xf32> to vector<8x16x128xf32>
    %c0_7 = arith.constant 0 : index
    %c0_8 = arith.constant 0 : index
    %21 = vector.load %arg4[%c0_7, %c0_8] : memref<16x128xf32, #tpu.memory_space<vmem>>, vector<16x128xf32>
    %22 = vector.shape_cast %21 : vector<16x128xf32> to vector<1x16x128xf32>
    %23 = vector.broadcast %22 : vector<1x16x128xf32> to vector<8x16x128xf32>
    %24 = arith.mulf %20, %23 : vector<8x16x128xf32>
    %cst_9 = arith.constant dense<0xFF800000> : vector<8x128xf32>
    %25 = vector.multi_reduction <maximumf>, %24, %cst_9 [1] : vector<8x16x128xf32> to vector<8x128xf32>
    %26 = arith.index_cast %1 : i32 to index
    %c0_10 = arith.constant 0 : index
    %27 = vector.load %arg8[%26, %c0_10] : memref<8x128xf32, #tpu.memory_space<vmem>>, vector<8x128xf32>
    tpu.vector_store %arg8[%26, %c0_10], %25 {strides = array<i32>} : memref<8x128xf32, #tpu.memory_space<vmem>>, vector<8x128xf32>,
    %c1_i32 = arith.constant 1 : i32
    %c0_11 = arith.constant 0 : index
    %c0_12 = arith.constant 0 : index
    %28 = vector.load %arg8[%c0_11, %c0_12] : memref<8x128xf32, #tpu.memory_space<vmem>>, vector<8x128xf32>
    %29 = arith.truncf %28 : vector<8x128xf32> to vector<8x128xbf16>
    %c0_13 = arith.constant 0 : index
    %c0_14 = arith.constant 0 : index
    %30 = vector.load %arg5[%c0_13, %c0_14] : memref<128x128xbf16, #tpu.memory_space<vmem>>, vector<128x128xbf16>
    %cst_15 = arith.constant dense<0.000000e+00> : vector<8x128xf32>
    %31 = tpu.matmul %29, %30, %cst_15 {dimension_numbers = #tpu.dot_dimension_numbers<[1], [0], [0], [1], [0, 0, 1, 1], [], []>} : vector<8x128xbf16>, vector<128x128xbf16>, vector<8x128xf32> -> vector<8x128xf32>
    %c0_16 = arith.constant 0 : index
    %c0_17 = arith.constant 0 : index
    %32 = vector.load %arg6[%c0_16, %c0_17] : memref<1x128xf32, #tpu.memory_space<vmem>>, vector<1x128xf32>
    %33 = vector.broadcast %32 : vector<1x128xf32> to vector<8x128xf32>
    %34 = arith.addf %31, %33 : vector<8x128xf32>
    %c0_18 = arith.constant 0 : index
    %c0_19 = arith.constant 0 : index
    %35 = vector.load %arg7[%c0_18, %c0_19] : memref<8x128xf32, #tpu.memory_space<vmem>>, vector<8x128xf32>
    tpu.vector_store %arg7[%c0_18, %c0_19], %34 {strides = array<i32>} : memref<8x128xf32, #tpu.memory_space<vmem>>, vector<8x128xf32>,
    return
  }
  func.func @transform_0(%arg0: i32) -> (i32, i32, i32) {
    %c0_i32 = arith.constant 0 : i32
    %c0_i32_0 = arith.constant 0 : i32
    %c0_i32_1 = arith.constant 0 : i32
    return %arg0, %c0_i32, %c0_i32_0 : i32, i32, i32
  }
  func.func @transform_1(%arg0: i32) -> (i32, i32) {
    %c0_i32 = arith.constant 0 : i32
    %c0_i32_0 = arith.constant 0 : i32
    %c0_i32_1 = arith.constant 0 : i32
    return %c0_i32, %c0_i32_0 : i32, i32
  }
  func.func @transform_2(%arg0: i32) -> (i32, i32) {
    %c0_i32 = arith.constant 0 : i32
    %c0_i32_0 = arith.constant 0 : i32
    %c0_i32_1 = arith.constant 0 : i32
    return %c0_i32, %c0_i32_0 : i32, i32
  }
  func.func @transform_3(%arg0: i32) -> (i32, i32) {
    %c0_i32 = arith.constant 0 : i32
    %c0_i32_0 = arith.constant 0 : i32
    %c0_i32_1 = arith.constant 0 : i32
    return %c0_i32, %c0_i32_0 : i32, i32
  }
  func.func @transform_4(%arg0: i32) -> (i32, i32) {
    %c0_i32 = arith.constant 0 : i32
    %c0_i32_0 = arith.constant 0 : i32
    %c0_i32_1 = arith.constant 0 : i32
    return %c0_i32, %c0_i32_0 : i32, i32
  }
  func.func @transform_5(%arg0: i32) -> (i32, i32) {
    %c0_i32 = arith.constant 0 : i32
    %c0_i32_0 = arith.constant 0 : i32
    %c0_i32_1 = arith.constant 0 : i32
    return %c0_i32, %c0_i32_0 : i32, i32
  }
  func.func @transform_6(%arg0: i32) -> (i32, i32) {
    %c0_i32 = arith.constant 0 : i32
    %c0_i32_0 = arith.constant 0 : i32
    return %arg0, %c0_i32 : i32, i32
  }
}

</mosaic_0001>

<llo_original>
// kernel: _lambda_.1
$region0: #{_lambda_.1}
  #allocation0 [shape = 'u32[]', space=smem, size = 0x4, offset = 0x4, fixed_abs, tag = 'smem constant byte address 0x4 - core index']
  #allocation1 [shape = 'u32[72,128]{1,0:T(1,128)}', space=vmem, size = 0x9000, scoped, tag = 'internal scratch']
  #allocation2 [shape = 'f32[8,128]{1,0:T(8,128)}', space=vmem, size = 0x1000, scoped, tag = 'scratch operand']
  %s0 = inlined_call_operand.vmem [shape: bf16[8,16,32], index: 0, kind: input, shape index: {}]
  %s1 = inlined_call_operand.vmem [shape: bf16[160,128], index: 1, kind: input, shape index: {}]
  %s2 = inlined_call_operand.vmem [shape: f32[1,128], index: 2, kind: input, shape index: {}]
  %s3 = inlined_call_operand.vmem [shape: f32[16,128], index: 3, kind: input, shape index: {}]
  %s4 = inlined_call_operand.vmem [shape: bf16[128,128], index: 4, kind: input, shape index: {}]
  %s5 = inlined_call_operand.vmem [shape: f32[1,128], index: 5, kind: input, shape index: {}]
  %s6 = inlined_call_operand.vmem [shape: f32[8,128], index: 6, kind: output, shape index: {}]
  %s7 = sld [smem:[#allocation0]]
  $region34: #{_lambda_.1} parent=0
    _
  %s9 = ssub.s32 1, %s7
  %s10 = scalar_select 0, %s9, %s7
  // Predicated region
  $region2: #{_lambda_.1} parent=0 // pred_check
    _
  $region3: #{_lambda_.1} parent=0 // pred_check_branch
    %12 = sbr.rel (0) target = $region5
  $region4: #{_lambda_.1} parent=0 // pred_region
    _
  $region5: #{_lambda_.1} parent=0 // pred_fallthru
    _
  // Predicated region
  $region6: #{_lambda_.1} parent=0 // pred_check
    _
  $region7: #{_lambda_.1} parent=0 // pred_check_branch
    %14 = sbr.rel (0) target = $region9
  $region8: #{_lambda_.1} parent=0 // pred_region
    _
  $region9: #{_lambda_.1} parent=0 // pred_fallthru
    _
  // Predicated region
  $region10: #{_lambda_.1} parent=0 // pred_check
    _
  $region11: #{_lambda_.1} parent=0 // pred_check_branch
    %16 = sbr.rel (0) target = $region13
  $region12: #{_lambda_.1} parent=0 // pred_region
    _
  $region13: #{_lambda_.1} parent=0 // pred_fallthru
    _
  // Predicated region
  $region14: #{_lambda_.1} parent=0 // pred_check
    _
  $region15: #{_lambda_.1} parent=0 // pred_check_branch
    %18 = sbr.rel (0) target = $region17
  $region16: #{_lambda_.1} parent=0 // pred_region
    _
  $region17: #{_lambda_.1} parent=0 // pred_fallthru
    _
  // Predicated region
  $region18: #{_lambda_.1} parent=0 // pred_check
    _
  $region19: #{_lambda_.1} parent=0 // pred_check_branch
    %20 = sbr.rel (0) target = $region21
  $region20: #{_lambda_.1} parent=0 // pred_region
    _
  $region21: #{_lambda_.1} parent=0 // pred_fallthru
    _
  // Predicated region
  $region22: #{_lambda_.1} parent=0 // pred_check
    _
  $region23: #{_lambda_.1} parent=0 // pred_check_branch
    %22 = sbr.rel (0) target = $region25
  $region24: #{_lambda_.1} parent=0 // pred_region
    _
  $region25: #{_lambda_.1} parent=0 // pred_fallthru
    _
  %s24 = smul.u32 0, 2
  %s25 = smul.addr %s24, 4
  %s26 = scalar_lea.vmem %s0, %s25
  %v27 = vld [vmem:[%s26] sm:$0xf]
  %v28 = vld [vmem:[%s26 + $0x4] sm:$0xf]
  %v29 = vld [vmem:[%s26 + $0x8] sm:$0xf]
  %v30 = vld [vmem:[%s26 + $0xc] sm:$0xf]
  %v31 = vld [vmem:[%s26 + $0x10] sm:$0xf]
  %v32 = vld [vmem:[%s26 + $0x14] sm:$0xf]
  %v33 = vld [vmem:[%s26 + $0x18] sm:$0xf]
  %v34 = vld [vmem:[%s26 + $0x1c] sm:$0xf]
  %v35 = vld [vmem:[%s26 + $0x20] sm:$0xf]
  %v36 = vld [vmem:[%s26 + $0x24] sm:$0xf]
  %v37 = vld [vmem:[%s26 + $0x28] sm:$0xf]
  %v38 = vld [vmem:[%s26 + $0x2c] sm:$0xf]
  %v39 = vld [vmem:[%s26 + $0x30] sm:$0xf]
  %v40 = vld [vmem:[%s26 + $0x34] sm:$0xf]
  %v41 = vld [vmem:[%s26 + $0x38] sm:$0xf]
  %v42 = vld [vmem:[%s26 + $0x3c] sm:$0xf]
  %v59 = vunpack.c.l.b16 %v27
  %v60 = vunpack.c.l.b16 %v28
  %v61 = vunpack.c.l.b16 %v29
  %v62 = vunpack.c.l.b16 %v30
  %v63 = vunpack.c.l.b16 %v31
  %v64 = vunpack.c.l.b16 %v32
  %v65 = vunpack.c.l.b16 %v33
  %v66 = vunpack.c.l.b16 %v34
  %v67 = vunpack.c.l.b16 %v35
  %v68 = vunpack.c.l.b16 %v36
  %v69 = vunpack.c.l.b16 %v37
  %v70 = vunpack.c.l.b16 %v38
  %v71 = vunpack.c.l.b16 %v39
  %v72 = vunpack.c.l.b16 %v40
  %v73 = vunpack.c.l.b16 %v41
  %v74 = vunpack.c.l.b16 %v42
  %v75 = vpack.c.b16 %v60, %v59
  %v76 = vpack.c.b16 %v62, %v61
  %v77 = vpack.c.b16 %v64, %v63
  %v78 = vpack.c.b16 %v66, %v65
  %v79 = vpack.c.b16 %v68, %v67
  %v80 = vpack.c.b16 %v70, %v69
  %v81 = vpack.c.b16 %v72, %v71
  %v82 = vpack.c.b16 %v74, %v73
  %vm83 = vsmask.f32 7424
  %v85 = vshrl.u32 %v75, 16
  %v87 = vshll.u32 %v75, 16
  %v89 = vrot.slane %v87, 1
  %v90 = vor.u32 %v85, %v89
  %v92 = vshll.u32 %v76, 16
  %v94 = vrot.slane %v92, 1
  %v95 = vsel %vm83, %v90, %v94
  %v96 = vshrl.u32 %v76, 16
  %v98 = vor.u32 %v96, %v94
  %v100 = vshll.u32 %v77, 16
  %v102 = vrot.slane %v100, 1
  %v103 = vsel %vm83, %v98, %v102
  %v104 = vshrl.u32 %v77, 16
  %v106 = vor.u32 %v104, %v102
  %v108 = vshll.u32 %v78, 16
  %v110 = vrot.slane %v108, 1
  %v111 = vsel %vm83, %v106, %v110
  %v112 = vshrl.u32 %v78, 16
  %v114 = vor.u32 %v112, %v110
  %v116 = vshll.u32 %v79, 16
  %v118 = vrot.slane %v116, 1
  %v119 = vsel %vm83, %v114, %v118
  %v120 = vshrl.u32 %v79, 16
  %v122 = vor.u32 %v120, %v118
  %v124 = vshll.u32 %v80, 16
  %v126 = vrot.slane %v124, 1
  %v127 = vsel %vm83, %v122, %v126
  %v128 = vshrl.u32 %v80, 16
  %v130 = vor.u32 %v128, %v126
  %v132 = vshll.u32 %v81, 16
  %v134 = vrot.slane %v132, 1
  %v135 = vsel %vm83, %v130, %v134
  %v136 = vshrl.u32 %v81, 16
  %v138 = vor.u32 %v136, %v134
  %v140 = vshll.u32 %v82, 16
  %v142 = vrot.slane %v140, 1
  %v143 = vsel %vm83, %v138, %v142
  %v144 = vshrl.u32 %v82, 16
  %v146 = vor.u32 %v144, %v142
  %v148 = vshll.u32 0, 16
  %v150 = vrot.slane %v148, 1
  %v151 = vsel %vm83, %v146, %v150
  %152 = vrot.lane.b32.xlu0 %v95, 32
  %v153 = vpop.permute.xlu0 %152
  %154 = vrot.lane.b32.xlu0 %v103, 32
  %v155 = vpop.permute.xlu0 %154
  %156 = vrot.lane.b32.xlu0 %v111, 32
  %v157 = vpop.permute.xlu0 %156
  %158 = vrot.lane.b32.xlu0 %v119, 32
  %v159 = vpop.permute.xlu0 %158
  %160 = vrot.lane.b32.xlu0 %v127, 32
  %v161 = vpop.permute.xlu0 %160
  %162 = vrot.lane.b32.xlu0 %v135, 32
  %v163 = vpop.permute.xlu0 %162
  %164 = vrot.lane.b32.xlu0 %v143, 32
  %v165 = vpop.permute.xlu0 %164
  %166 = vrot.lane.b32.xlu0 %v151, 32
  %v167 = vpop.permute.xlu0 %166
  %vm169 = vcmask 1046528
  %v170 = vrot.slane %v75, 1
  %v171 = vrot.slane %v76, 1
  %v172 = vsel %vm169, %v170, %v171
  %v173 = vrot.slane %v77, 1
  %v174 = vsel %vm169, %v171, %v173
  %v175 = vrot.slane %v78, 1
  %v176 = vsel %vm169, %v173, %v175
  %v177 = vrot.slane %v79, 1
  %v178 = vsel %vm169, %v175, %v177
  %v179 = vrot.slane %v80, 1
  %v180 = vsel %vm169, %v177, %v179
  %v181 = vrot.slane %v81, 1
  %v182 = vsel %vm169, %v179, %v181
  %v183 = vrot.slane %v82, 1
  %v184 = vsel %vm169, %v181, %v183
  %v185 = vrot.slane 0, 1
  %v186 = vsel %vm169, %v183, %v185
  %187 = vrot.lane.b32.xlu0 %v172, 64
  %v188 = vpop.permute.xlu0 %187
  %189 = vrot.lane.b32.xlu0 %v174, 64
  %v190 = vpop.permute.xlu0 %189
  %191 = vrot.lane.b32.xlu0 %v176, 64
  %v192 = vpop.permute.xlu0 %191
  %193 = vrot.lane.b32.xlu0 %v178, 64
  %v194 = vpop.permute.xlu0 %193
  %195 = vrot.lane.b32.xlu0 %v180, 64
  %v196 = vpop.permute.xlu0 %195
  %197 = vrot.lane.b32.xlu0 %v182, 64
  %v198 = vpop.permute.xlu0 %197
  %199 = vrot.lane.b32.xlu0 %v184, 64
  %v200 = vpop.permute.xlu0 %199
  %201 = vrot.lane.b32.xlu0 %v186, 64
  %v202 = vpop.permute.xlu0 %201
  %vm203 = vsmask.f32 6400
  %v204 = vrot.slane %v85, 1
  %v205 = vrot.slane %v87, 2
  %v206 = vor.u32 %v204, %v205
  %v207 = vrot.slane %v96, 1
  %v208 = vrot.slane %v92, 2
  %v209 = vor.u32 %v207, %v208
  %v210 = vsel %vm203, %v206, %v209
  %v211 = vrot.slane %v104, 1
  %v212 = vrot.slane %v100, 2
  %v213 = vor.u32 %v211, %v212
  %v214 = vsel %vm203, %v209, %v213
  %v215 = vrot.slane %v112, 1
  %v216 = vrot.slane %v108, 2
  %v217 = vor.u32 %v215, %v216
  %v218 = vsel %vm203, %v213, %v217
  %v219 = vrot.slane %v120, 1
  %v220 = vrot.slane %v116, 2
  %v221 = vor.u32 %v219, %v220
  %v222 = vsel %vm203, %v217, %v221
  %v223 = vrot.slane %v128, 1
  %v224 = vrot.slane %v124, 2
  %v225 = vor.u32 %v223, %v224
  %v226 = vsel %vm203, %v221, %v225
  %v227 = vrot.slane %v136, 1
  %v228 = vrot.slane %v132, 2
  %v229 = vor.u32 %v227, %v228
  %v230 = vsel %vm203, %v225, %v229
  %v231 = vrot.slane %v144, 1
  %v232 = vrot.slane %v140, 2
  %v233 = vor.u32 %v231, %v232
  %v234 = vsel %vm203, %v229, %v233
  %v235 = vshrl.u32 0, 16
  %v237 = vrot.slane %v235, 1
  %v238 = vrot.slane %v148, 2
  %v239 = vor.u32 %v237, %v238
  %v240 = vsel %vm203, %v233, %v239
  %241 = vrot.lane.b32.xlu0 %v210, 96
  %v242 = vpop.permute.xlu0 %241
  %243 = vrot.lane.b32.xlu0 %v214, 96
  %v244 = vpop.permute.xlu0 %243
  %245 = vrot.lane.b32.xlu0 %v218, 96
  %v246 = vpop.permute.xlu0 %245
  %247 = vrot.lane.b32.xlu0 %v222, 96
  %v248 = vpop.permute.xlu0 %247
  %249 = vrot.lane.b32.xlu0 %v226, 96
  %v250 = vpop.permute.xlu0 %249
  %251 = vrot.lane.b32.xlu0 %v230, 96
  %v252 = vpop.permute.xlu0 %251
  %253 = vrot.lane.b32.xlu0 %v234, 96
  %v254 = vpop.permute.xlu0 %253
  %255 = vrot.lane.b32.xlu0 %v240, 96
  %v256 = vpop.permute.xlu0 %255
  %vm257 = vcmask 1045504
  %v258 = vrot.slane %v75, 2
  %v259 = vrot.slane %v76, 2
  %v260 = vsel %vm257, %v258, %v259
  %v261 = vrot.slane %v77, 2
  %v262 = vsel %vm257, %v259, %v261
  %v263 = vrot.slane %v78, 2
  %v264 = vsel %vm257, %v261, %v263
  %v265 = vrot.slane %v79, 2
  %v266 = vsel %vm257, %v263, %v265
  %v267 = vrot.slane %v80, 2
  %v268 = vsel %vm257, %v265, %v267
  %v269 = vrot.slane %v81, 2
  %v270 = vsel %vm257, %v267, %v269
  %v271 = vrot.slane %v82, 2
  %v272 = vsel %vm257, %v269, %v271
  %v273 = vrot.slane 0, 2
  %v274 = vsel %vm257, %v271, %v273
  %vm275 = vcmask 261120
  %v277 = vsel %vm275, %v75, %v153
  %v279 = vsel %vm275, %v76, %v155
  %v281 = vsel %vm275, %v77, %v157
  %v283 = vsel %vm275, %v78, %v159
  %v285 = vsel %vm275, %v79, %v161
  %v287 = vsel %vm275, %v80, %v163
  %v289 = vsel %vm275, %v81, %v165
  %v291 = vsel %vm275, %v82, %v167
  %vm292 = vcmask 523264
  %v294 = vsel %vm292, %v277, %v188
  %v296 = vsel %vm292, %v279, %v190
  %v298 = vsel %vm292, %v281, %v192
  %v300 = vsel %vm292, %v283, %v194
  %v302 = vsel %vm292, %v285, %v196
  %v304 = vsel %vm292, %v287, %v198
  %v306 = vsel %vm292, %v289, %v200
  %v308 = vsel %vm292, %v291, %v202
  %vm309 = vcmask 785408
  %v311 = vsel %vm309, %v294, %v242
  %v314 = vsel %vm309, %v296, %v244
  %v317 = vsel %vm309, %v298, %v246
  %v320 = vsel %vm309, %v300, %v248
  %v323 = vsel %vm309, %v302, %v250
  %v326 = vsel %vm309, %v304, %v252
  %v329 = vsel %vm309, %v306, %v254
  %v332 = vsel %vm309, %v308, %v256
  %v334 = vld [vmem:[%s1] sm:$0xf]
  %v335 = vld [vmem:[%s1 + $0x4] sm:$0xf]
  %v336 = vld [vmem:[%s1 + $0x8] sm:$0xf]
  %v337 = vld [vmem:[%s1 + $0xc] sm:$0xf]
  %v338 = vld [vmem:[%s1 + $0x10] sm:$0xf]
  %v339 = vld [vmem:[%s1 + $0x14] sm:$0xf]
  %v340 = vld [vmem:[%s1 + $0x18] sm:$0xf]
  %v341 = vld [vmem:[%s1 + $0x1c] sm:$0xf]
  %v342 = vld [vmem:[%s1 + $0x20] sm:$0xf]
  %v343 = vld [vmem:[%s1 + $0x24] sm:$0xf]
  %v344 = vld [vmem:[%s1 + $0x28] sm:$0xf]
  %v345 = vld [vmem:[%s1 + $0x2c] sm:$0xf]
  %v346 = vld [vmem:[%s1 + $0x30] sm:$0xf]
  %v347 = vld [vmem:[%s1 + $0x34] sm:$0xf]
  %v348 = vld [vmem:[%s1 + $0x38] sm:$0xf]
  %v349 = vld [vmem:[%s1 + $0x3c] sm:$0xf]
  %v350 = vld [vmem:[%s1 + $0x40] sm:$0xf]
  %v351 = vld [vmem:[%s1 + $0x44] sm:$0xf]
  %v352 = vld [vmem:[%s1 + $0x48] sm:$0xf]
  %v353 = vld [vmem:[%s1 + $0x4c] sm:$0xf]
  %v354 = vld [vmem:[%s2] sm:$0x1]
  %v356 = vperm.slane %v354, 0
  %v378 = vunpack.c.l.b16 %v334
  %v379 = vunpack.c.l.b16 %v335
  %v380 = vunpack.c.l.b16 %v336
  %v381 = vunpack.c.l.b16 %v337
  %v382 = vunpack.c.l.b16 %v338
  %v383 = vunpack.c.l.b16 %v339
  %v384 = vunpack.c.l.b16 %v340
  %v385 = vunpack.c.l.b16 %v341
  %v386 = vunpack.c.l.b16 %v342
  %v387 = vunpack.c.l.b16 %v343
  %v388 = vunpack.c.l.b16 %v344
  %v389 = vunpack.c.l.b16 %v345
  %v390 = vunpack.c.l.b16 %v346
  %v391 = vunpack.c.l.b16 %v347
  %v392 = vunpack.c.l.b16 %v348
  %v393 = vunpack.c.l.b16 %v349
  %v394 = vunpack.c.l.b16 %v350
  %v395 = vunpack.c.l.b16 %v351
  %v396 = vunpack.c.l.b16 %v352
  %v397 = vunpack.c.l.b16 %v353
  %v398 = vpack.c.b16 %v379, %v378
  %v399 = vpack.c.b16 %v381, %v380
  %v400 = vpack.c.b16 %v383, %v382
  %v401 = vpack.c.b16 %v385, %v384
  %v402 = vpack.c.b16 %v387, %v386
  %v403 = vpack.c.b16 %v389, %v388
  %v404 = vpack.c.b16 %v391, %v390
  %v405 = vpack.c.b16 %v393, %v392
  %v406 = vpack.c.b16 %v395, %v394
  %v407 = vpack.c.b16 %v397, %v396
  %v419 = vsel %vm275, %v260, 0
  %v422 = vsel %vm275, %v262, 0
  %v425 = vsel %vm275, %v264, 0
  %v428 = vsel %vm275, %v266, 0
  %v431 = vsel %vm275, %v268, 0
  %v434 = vsel %vm275, %v270, 0
  %v437 = vsel %vm275, %v272, 0
  %v440 = vsel %vm275, %v274, 0
  %442 = vmatpush.bf16.msra.mxu0 %v405
  %443 = vmatpush.bf16.msra.mxu0 %v404
  %444 = vmatpush.bf16.msra.mxu0 %v403
  %445 = vmatpush.bf16.msra.mxu0 %v402
  %446 = vmatpush.bf16.msra.mxu0 %v401
  %447 = vmatpush.bf16.msra.mxu0 %v400
  %448 = vmatpush.bf16.msra.mxu0 %v399
  %449 = vmatpush.bf16.msra.mxu0 %v398
  %450 = vmatmul.bf16.gmra.mxu0 %v311
  %v451 = vpop.f32.mrf.mxu0
  %v452 = vadd.f32 %v356, %v451
  %v453 = vpop.f32.mrf.mxu0
  %v454 = vadd.f32 %v356, %v453
  %455 = vmatmul.bf16.gmra.mxu0 %v314
  %v456 = vpop.f32.mrf.mxu0
  %v457 = vadd.f32 %v356, %v456
  %v458 = vpop.f32.mrf.mxu0
  %v459 = vadd.f32 %v356, %v458
  %460 = vmatmul.bf16.gmra.mxu0 %v317
  %v461 = vpop.f32.mrf.mxu0
  %v462 = vadd.f32 %v356, %v461
  %v463 = vpop.f32.mrf.mxu0
  %v464 = vadd.f32 %v356, %v463
  %465 = vmatmul.bf16.gmra.mxu0 %v320
  %v466 = vpop.f32.mrf.mxu0
  %v467 = vadd.f32 %v356, %v466
  %v468 = vpop.f32.mrf.mxu0
  %v469 = vadd.f32 %v356, %v468
  %470 = vmatmul.bf16.gmra.mxu0 %v323
  %v471 = vpop.f32.mrf.mxu0
  %v472 = vadd.f32 %v356, %v471
  %v473 = vpop.f32.mrf.mxu0
  %v474 = vadd.f32 %v356, %v473
  %475 = vmatmul.bf16.gmra.mxu0 %v326
  %v476 = vpop.f32.mrf.mxu0
  %v477 = vadd.f32 %v356, %v476
  %v478 = vpop.f32.mrf.mxu0
  %v479 = vadd.f32 %v356, %v478
  %480 = vmatmul.bf16.gmra.mxu0 %v329
  %v481 = vpop.f32.mrf.mxu0
  %v482 = vadd.f32 %v356, %v481
  %v483 = vpop.f32.mrf.mxu0
  %v484 = vadd.f32 %v356, %v483
  %485 = vmatmul.bf16.gmra.mxu0 %v332
  %v486 = vpop.f32.mrf.mxu0
  %v487 = vadd.f32 %v356, %v486
  %v488 = vpop.f32.mrf.mxu0
  %v489 = vadd.f32 %v356, %v488
  %490 = vdwg.mxu0
  %491 = vmatpush.bf16.msra.mxu0 0
  %492 = vmatpush.bf16.msra.mxu0 0
  %493 = vmatpush.bf16.msra.mxu0 0
  %494 = vmatpush.bf16.msra.mxu0 0
  %495 = vmatpush.bf16.msra.mxu0 0
  %496 = vmatpush.bf16.msra.mxu0 0
  %497 = vmatpush.bf16.msra.mxu0 %v407
  %498 = vmatpush.bf16.msra.mxu0 %v406
  %499 = vmatmul.bf16.gmra.mxu0 %v419
  %v500 = vpop.f32.mrf.mxu0
  %v501 = vadd.f32 %v452, %v500
  %v502 = vpop.f32.mrf.mxu0
  %v503 = vadd.f32 %v454, %v502
  %504 = vmatmul.bf16.gmra.mxu0 %v422
  %v505 = vpop.f32.mrf.mxu0
  %v506 = vadd.f32 %v457, %v505
  %v507 = vpop.f32.mrf.mxu0
  %v508 = vadd.f32 %v459, %v507
  %509 = vmatmul.bf16.gmra.mxu0 %v425
  %v510 = vpop.f32.mrf.mxu0
  %v511 = vadd.f32 %v462, %v510
  %v512 = vpop.f32.mrf.mxu0
  %v513 = vadd.f32 %v464, %v512
  %514 = vmatmul.bf16.gmra.mxu0 %v428
  %v515 = vpop.f32.mrf.mxu0
  %v516 = vadd.f32 %v467, %v515
  %v517 = vpop.f32.mrf.mxu0
  %v518 = vadd.f32 %v469, %v517
  %519 = vmatmul.bf16.gmra.mxu0 %v431
  %v520 = vpop.f32.mrf.mxu0
  %v521 = vadd.f32 %v472, %v520
  %v522 = vpop.f32.mrf.mxu0
  %v523 = vadd.f32 %v474, %v522
  %524 = vmatmul.bf16.gmra.mxu0 %v434
  %v525 = vpop.f32.mrf.mxu0
  %v526 = vadd.f32 %v477, %v525
  %v527 = vpop.f32.mrf.mxu0
  %v528 = vadd.f32 %v479, %v527
  %529 = vmatmul.bf16.gmra.mxu0 %v437
  %v530 = vpop.f32.mrf.mxu0
  %v531 = vadd.f32 %v482, %v530
  %v532 = vpop.f32.mrf.mxu0
  %v533 = vadd.f32 %v484, %v532
  %534 = vmatmul.bf16.gmra.mxu0 %v440
  %v535 = vpop.f32.mrf.mxu0
  %v536 = vadd.f32 %v487, %v535
  %v537 = vpop.f32.mrf.mxu0
  %v538 = vadd.f32 %v489, %v537
  %539 = vdwg.mxu0
  %v540 = vmax.f32 %v501, 0.0
  %v541 = vmax.f32 %v503, 0.0
  %v542 = vmax.f32 %v506, 0.0
  %v543 = vmax.f32 %v508, 0.0
  %v544 = vmax.f32 %v511, 0.0
  %v545 = vmax.f32 %v513, 0.0
  %v546 = vmax.f32 %v516, 0.0
  %v547 = vmax.f32 %v518, 0.0
  %v548 = vmax.f32 %v521, 0.0
  %v549 = vmax.f32 %v523, 0.0
  %v550 = vmax.f32 %v526, 0.0
  %v551 = vmax.f32 %v528, 0.0
  %v552 = vmax.f32 %v531, 0.0
  %v553 = vmax.f32 %v533, 0.0
  %v554 = vmax.f32 %v536, 0.0
  %v555 = vmax.f32 %v538, 0.0
  %v556 = vld [vmem:[%s3] sm:$0xff]
  %v557 = vld [vmem:[%s3 + $0x8] sm:$0xff]
  %v558 = vmul.f32 %v540, %v556
  %v559 = vmul.f32 %v541, %v557
  %v560 = vmul.f32 %v542, %v556
  %v561 = vmul.f32 %v543, %v557
  %v562 = vmul.f32 %v544, %v556
  %v563 = vmul.f32 %v545, %v557
  %v564 = vmul.f32 %v546, %v556
  %v565 = vmul.f32 %v547, %v557
  %v566 = vmul.f32 %v548, %v556
  %v567 = vmul.f32 %v549, %v557
  %v568 = vmul.f32 %v550, %v556
  %v569 = vmul.f32 %v551, %v557
  %v570 = vmul.f32 %v552, %v556
  %v571 = vmul.f32 %v553, %v557
  %v572 = vmul.f32 %v554, %v556
  %v573 = vmul.f32 %v555, %v557
  %v574 = vmax.f32 %v558, %v559
  %v575 = vrot.slane %v574, 4
  %v576 = vmax.f32 %v574, %v575
  %v577 = vrot.slane %v576, 2
  %v578 = vmax.f32 %v576, %v577
  %v579 = vrot.slane %v578, 1
  %v580 = vmax.f32 %v578, %v579
  %v581 = vmax.f32 %v560, %v561
  %v582 = vrot.slane %v581, 4
  %v583 = vmax.f32 %v581, %v582
  %v584 = vrot.slane %v583, 2
  %v585 = vmax.f32 %v583, %v584
  %v586 = vrot.slane %v585, 1
  %v587 = vmax.f32 %v585, %v586
  %v588 = vmax.f32 %v562, %v563
  %v589 = vrot.slane %v588, 4
  %v590 = vmax.f32 %v588, %v589
  %v591 = vrot.slane %v590, 2
  %v592 = vmax.f32 %v590, %v591
  %v593 = vrot.slane %v592, 1
  %v594 = vmax.f32 %v592, %v593
  %v595 = vmax.f32 %v564, %v565
  %v596 = vrot.slane %v595, 4
  %v597 = vmax.f32 %v595, %v596
  %v598 = vrot.slane %v597, 2
  %v599 = vmax.f32 %v597, %v598
  %v600 = vrot.slane %v599, 1
  %v601 = vmax.f32 %v599, %v600
  %v602 = vmax.f32 %v566, %v567
  %v603 = vrot.slane %v602, 4
  %v604 = vmax.f32 %v602, %v603
  %v605 = vrot.slane %v604, 2
  %v606 = vmax.f32 %v604, %v605
  %v607 = vrot.slane %v606, 1
  %v608 = vmax.f32 %v606, %v607
  %v609 = vmax.f32 %v568, %v569
  %v610 = vrot.slane %v609, 4
  %v611 = vmax.f32 %v609, %v610
  %v612 = vrot.slane %v611, 2
  %v613 = vmax.f32 %v611, %v612
  %v614 = vrot.slane %v613, 1
  %v615 = vmax.f32 %v613, %v614
  %v616 = vmax.f32 %v570, %v571
  %v617 = vrot.slane %v616, 4
  %v618 = vmax.f32 %v616, %v617
  %v619 = vrot.slane %v618, 2
  %v620 = vmax.f32 %v618, %v619
  %v621 = vrot.slane %v620, 1
  %v622 = vmax.f32 %v620, %v621
  %v623 = vmax.f32 %v572, %v573
  %v624 = vrot.slane %v623, 4
  %v625 = vmax.f32 %v623, %v624
  %v626 = vrot.slane %v625, 2
  %v627 = vmax.f32 %v625, %v626
  %v628 = vrot.slane %v627, 1
  %v629 = vmax.f32 %v627, %v628
  %vm638 = vcmask 1041409
  %v639 = vsel %vm638, %v587, %v580
  %vm640 = vcmask 1042434
  %v641 = vsel %vm640, %v594, %v639
  %vm642 = vcmask 1043459
  %v643 = vsel %vm642, %v601, %v641
  %vm644 = vcmask 1044484
  %v645 = vsel %vm644, %v608, %v643
  %vm646 = vcmask 1045509
  %v647 = vsel %vm646, %v615, %v645
  %vm648 = vcmask 1046534
  %v649 = vsel %vm648, %v622, %v647
  %vm650 = vcmask 1047559
  %v651 = vsel %vm650, %v629, %v649
  %653 = vst [vmem:[#allocation2] sm:$0xff] %v651
  %v654 = vld [vmem:[#allocation2] sm:$0xff]
  %v655 = vpack.c.bf16 %v654, %v654
  %v656 = vld [vmem:[%s4] sm:$0xf]
  %v657 = vld [vmem:[%s4 + $0x4] sm:$0xf]
  %v658 = vld [vmem:[%s4 + $0x8] sm:$0xf]
  %v659 = vld [vmem:[%s4 + $0xc] sm:$0xf]
  %v660 = vld [vmem:[%s4 + $0x10] sm:$0xf]
  %v661 = vld [vmem:[%s4 + $0x14] sm:$0xf]
  %v662 = vld [vmem:[%s4 + $0x18] sm:$0xf]
  %v663 = vld [vmem:[%s4 + $0x1c] sm:$0xf]
  %v664 = vld [vmem:[%s4 + $0x20] sm:$0xf]
  %v665 = vld [vmem:[%s4 + $0x24] sm:$0xf]
  %v666 = vld [vmem:[%s4 + $0x28] sm:$0xf]
  %v667 = vld [vmem:[%s4 + $0x2c] sm:$0xf]
  %v668 = vld [vmem:[%s4 + $0x30] sm:$0xf]
  %v669 = vld [vmem:[%s4 + $0x34] sm:$0xf]
  %v670 = vld [vmem:[%s4 + $0x38] sm:$0xf]
  %v671 = vld [vmem:[%s4 + $0x3c] sm:$0xf]
  %v672 = vld [vmem:[%s5] sm:$0x1]
  %v674 = vperm.slane %v672, 0
  %v692 = vunpack.c.l.b16 %v656
  %v693 = vunpack.c.l.b16 %v657
  %v694 = vunpack.c.l.b16 %v658
  %v695 = vunpack.c.l.b16 %v659
  %v696 = vunpack.c.l.b16 %v660
  %v697 = vunpack.c.l.b16 %v661
  %v698 = vunpack.c.l.b16 %v662
  %v699 = vunpack.c.l.b16 %v663
  %v700 = vunpack.c.l.b16 %v664
  %v701 = vunpack.c.l.b16 %v665
  %v702 = vunpack.c.l.b16 %v666
  %v703 = vunpack.c.l.b16 %v667
  %v704 = vunpack.c.l.b16 %v668
  %v705 = vunpack.c.l.b16 %v669
  %v706 = vunpack.c.l.b16 %v670
  %v707 = vunpack.c.l.b16 %v671
  %v708 = vpack.c.b16 %v693, %v692
  %v709 = vpack.c.b16 %v695, %v694
  %v710 = vpack.c.b16 %v697, %v696
  %v711 = vpack.c.b16 %v699, %v698
  %v712 = vpack.c.b16 %v701, %v700
  %v713 = vpack.c.b16 %v703, %v702
  %v714 = vpack.c.b16 %v705, %v704
  %v715 = vpack.c.b16 %v707, %v706
  %724 = vmatpush.bf16.msra.mxu0 %v715
  %725 = vmatpush.bf16.msra.mxu0 %v714
  %726 = vmatpush.bf16.msra.mxu0 %v713
  %727 = vmatpush.bf16.msra.mxu0 %v712
  %728 = vmatpush.bf16.msra.mxu0 %v711
  %729 = vmatpush.bf16.msra.mxu0 %v710
  %730 = vmatpush.bf16.msra.mxu0 %v709
  %731 = vmatpush.bf16.msra.mxu0 %v708
  %732 = vmatmul.bf16.gmra.mxu0 %v655
  %v733 = vpop.f32.mrf.mxu0
  %v734 = vadd.f32 %v674, %v733
  %v735 = vpop.f32.mrf.mxu0
  %736 = vdwg.mxu0
  %737 = vst [vmem:[%s6] sm:$0xff] %v734
  // Predicated region
  $region26: #{_lambda_.1} parent=0 // pred_check
    _
  $region27: #{_lambda_.1} parent=0 // pred_check_branch
    %739 = sbr.rel (0) target = $region29
  $region28: #{_lambda_.1} parent=0 // pred_region
    _
  $region29: #{_lambda_.1} parent=0 // pred_fallthru
    _
  // Predicated region
  $region30: #{_lambda_.1} parent=0 // pred_check
    _
  $region31: #{_lambda_.1} parent=0 // pred_check_branch
    %741 = sbr.rel (0) target = $region33
  $region32: #{_lambda_.1} parent=0 // pred_region
    _
  $region33: #{_lambda_.1} parent=0 // pred_fallthru
    _

</llo_original>
